<compile_context>
chip_gen: v6e
topology: v6e:2x2x1
jax: 0.10.0
libtpu: 0.0.40
codegen_flags: <defaults>
</compile_context>

<pallas_src>
import functools

import jax
import jax.numpy as jnp
from jax import lax
from jax.experimental import pallas as pl
from jax.experimental.pallas import tpu as pltpu

EPS = 1e-5
_PASS1_BLOCK_BYTES = 4 << 20   # pass 1: x read-stream only, tiny partial-sum outputs
_PASS2_BLOCK_BYTES = 2 << 20   # pass 2: x-in and y-out both double-buffered
_VMEM_LIMIT_BYTES = 32 * 1024 * 1024


def _round_up(a, b):
    return ((a + b - 1) // b) * b


def _expand_mask(m, oh_ref, n_lanes):
    """(tile, P) packed-row mask -> (tile, n_lanes) element mask.

    P == 1: plain lane broadcast.  P > 1: one MXU matmul against the constant
    (P, L) one-hot segment matrix.  Operands are exactly 0/1 and each output
    element has a single non-zero term, so the result is exact at any matmul
    precision, and the expansion stays off the binding VPU slots.
    """
    tile, p = m.shape
    if p == 1:
        return jnp.broadcast_to(m, (tile, n_lanes))
    return jnp.dot(m, oh_ref[...], preferred_element_type=jnp.float32)


# ---------------------------------------------------------------------------
# Pass 1: per-chunk masked partial sums (fully parallel; reduced in wrapper).
# ---------------------------------------------------------------------------
def _stats_kernel(x_ref, m_ref, oh_ref, sum_ref, sumsq_ref, *, rows, ragged):
    x = x_ref[...].astype(jnp.float32)                      # (tile, L)
    m = m_ref[...].astype(jnp.float32)                      # (tile, P)
    tile, lanes = x.shape
    if ragged:
        # Last block may read past the end of the array; those rows are garbage
        # (possibly NaN), so force both x and the mask to exact zero there.
        bound = rows - pl.program_id(0) * tile
        rid_x = lax.broadcasted_iota(jnp.int32, x.shape, 0)
        rid_m = lax.broadcasted_iota(jnp.int32, m.shape, 0)
        x = jnp.where(rid_x < bound, x, 0.0)
        m = jnp.where(rid_m < bound, m, 0.0)
    me = _expand_mask(m, oh_ref, lanes)                     # (tile, L), MXU
    xm = x * me
    # Fold the tile down to an (8, L) partial with exact f32 vreg adds (VPU);
    # the cross-chunk / cross-sublane reduction is finished in the wrapper.
    sum_ref[...] = jnp.sum(xm.reshape(tile // 8, 8, lanes), axis=0)
    sumsq_ref[...] = jnp.sum((xm * x).reshape(tile // 8, 8, lanes), axis=0)


# ---------------------------------------------------------------------------
# Pass 2: normalize — (x * rstd - mean*rstd) * mask with resident constants.
# ---------------------------------------------------------------------------
def _norm_kernel(x_ref, m_ref, oh_ref, a_ref, b_ref, o_ref):
    x = x_ref[...].astype(jnp.float32)                      # (tile, L)
    m = m_ref[...].astype(jnp.float32)                      # (tile, P)
    me = _expand_mask(m, oh_ref, x.shape[-1])               # (tile, L), MXU
    o_ref[...] = ((x * a_ref[...] - b_ref[...]) * me).astype(o_ref.dtype)
    # Out-of-bounds rows of a ragged last block are never written back, so no
    # explicit bound is needed here.


def _pick_tile(rows, budget_bytes, lanes, itemsize, sub):
    """Rows per block for a (rows, lanes) array streamed through VMEM.

    Only called when rows >= 2*sub; always returns a multiple of `sub` that is
    < rows, so the grid has at least two chunks (v7x megacore sharding).
    """
    budget_rows = max(sub, (budget_bytes // (lanes * itemsize)) // sub * sub)
    half = _round_up(-(-rows // 2), sub)
    return max(sub, min(budget_rows, half))


def custom_batch_norm(x, mask):
    """x: (B, T, C) float; mask: (B, T) bool / 0-1 (True = valid, not padded)."""
    B, T, C = x.shape
    N = B * T
    itemsize = jnp.dtype(x.dtype).itemsize
    sub = {4: 8, 2: 16, 1: 32}.get(itemsize, 8)             # sublane granularity

    # Lane packing: fold P original rows into one 128-lane row so both loads and
    # (critically) output stores are lane-dense.  P must divide N so no full-size
    # pad is ever needed.
    P = 1
    if 1 <= C <= 128 and 128 % C == 0:
        P = 128 // C
        while P > 1 and N % P:
            P //= 2
    L = C * P
    rows = N // P

    x_flat = x.reshape(N * C)
    m_flat = mask.reshape(N).astype(jnp.float32)            # narrow mask stream

    small = rows < 2 * sub
    if small:
        # Whole problem is a few KiB: pad to one aligned block (negligible copy).
        rows_p = _round_up(rows, sub)
        if rows_p > rows:
            x_flat = jnp.pad(x_flat, (0, (rows_p - rows) * L))
            m_flat = jnp.pad(m_flat, (0, (rows_p - rows) * P))
        tile1 = tile2 = rows_p
    else:
        rows_p = rows                                       # no pad; ragged tail in-kernel
        tile1 = _pick_tile(rows_p, _PASS1_BLOCK_BYTES, L, itemsize, sub)
        tile2 = _pick_tile(rows_p, _PASS2_BLOCK_BYTES, L, itemsize, sub)

    x_view = x_flat.reshape(rows_p, L)                      # lane-dense view (free reshape)
    m_view = m_flat.reshape(rows_p, P)

    n1 = pl.cdiv(rows_p, tile1)
    n2 = pl.cdiv(rows_p, tile2)
    ragged1 = (rows_p % tile1) != 0

    # Constant one-hot segment matrix for MXU mask expansion: onehot[k, j] = (j//C == k)
    if P > 1:
        seg = jnp.arange(L, dtype=jnp.int32) // C
        onehot = (seg[None, :] == jnp.arange(P, dtype=jnp.int32)[:, None]).astype(jnp.float32)
    else:
        onehot = jnp.ones((1, L), jnp.float32)

    # ---- pass 1: masked partial sums (parallel over chunks / TensorCores) ----
    s_part, ssq_part = pl.pallas_call(
        functools.partial(_stats_kernel, rows=rows_p, ragged=ragged1),
        out_shape=(
            jax.ShapeDtypeStruct((n1 * 8, L), jnp.float32),
            jax.ShapeDtypeStruct((n1 * 8, L), jnp.float32),
        ),
        grid_spec=pltpu.PrefetchScalarGridSpec(
            num_scalar_prefetch=0,
            grid=(n1,),
            in_specs=[
                pl.BlockSpec((tile1, L), lambda i: (i, 0)),
                pl.BlockSpec((tile1, P), lambda i: (i, 0)),
                pl.BlockSpec((P, L), lambda i: (0, 0)),     # resident one-hot
            ],
            out_specs=[
                pl.BlockSpec((8, L), lambda i: (i, 0)),
                pl.BlockSpec((8, L), lambda i: (i, 0)),
            ],
        ),
        compiler_params=pltpu.CompilerParams(
            dimension_semantics=("parallel",),
            vmem_limit_bytes=_VMEM_LIMIT_BYTES),
    )(x_view, m_view, onehot)

    # ---- finalize statistics once, in the wrapper (tiny) ----
    cnt = jnp.maximum(jnp.sum(mask.astype(jnp.float32)), 1.0)      # guard cnt==0
    s = jnp.sum(s_part, axis=0).reshape(P, C).sum(axis=0)          # (C,)
    ssq = jnp.sum(ssq_part, axis=0).reshape(P, C).sum(axis=0)      # (C,)
    mean = s / cnt
    var = jnp.maximum(ssq / cnt - mean * mean, 0.0)                 # biased (/N) var, like BN
    rstd = lax.rsqrt(var + EPS)
    a = jnp.tile(rstd, (P,)).reshape(1, L)                          # per-lane scale
    b = jnp.tile(mean * rstd, (P,)).reshape(1, L)                   # per-lane shift (fused)

    # ---- pass 2: normalize (parallel, lane-dense output stores) ----
    y_view = pl.pallas_call(
        _norm_kernel,
        out_shape=jax.ShapeDtypeStruct((rows_p, L), x.dtype),
        grid_spec=pltpu.PrefetchScalarGridSpec(
            num_scalar_prefetch=0,
            grid=(n2,),
            in_specs=[
                pl.BlockSpec((tile2, L), lambda i: (i, 0)),
                pl.BlockSpec((tile2, P), lambda i: (i, 0)),
                pl.BlockSpec((P, L), lambda i: (0, 0)),     # resident one-hot
                pl.BlockSpec((1, L), lambda i: (0, 0)),     # resident a = rstd
                pl.BlockSpec((1, L), lambda i: (0, 0)),     # resident b = mean*rstd
            ],
            out_specs=pl.BlockSpec((tile2, L), lambda i: (i, 0)),
        ),
        compiler_params=pltpu.CompilerParams(
            dimension_semantics=("parallel",),
            vmem_limit_bytes=_VMEM_LIMIT_BYTES),
    )(x_view, m_view, onehot, a, b)

    if rows_p != rows:                                      # only the tiny-input path
        y = y_view.reshape(-1, C)[:N]
    else:
        y = y_view.reshape(N, C)
    return y.reshape(B, T, C)


def _reference(x, mask):
    m = mask.reshape(-1, 1).astype(jnp.float32)
    xf = x.reshape(-1, x.shape[-1]).astype(jnp.float32)
    cnt = jnp.maximum(jnp.sum(m), 1.0)
    mean = jnp.sum(xf * m, axis=0) / cnt
    var = jnp.maximum(jnp.sum((xf * m) * xf, axis=0) / cnt - mean * mean, 0.0)
    y = (xf - mean) * lax.rsqrt(var + EPS) * m
    return y.reshape(x.shape).astype(x.dtype)


if __name__ == "__main__":
    key = jax.random.PRNGKey(0)
    B, T, C = 2, 8, 32
    x = jax.random.normal(key, (B, T, C), dtype=jnp.float32)
    # deterministic padding mask: first 6 / 5 timesteps valid per sequence
    lengths = jnp.array([6, 5], dtype=jnp.int32)
    mask = jnp.arange(T)[None, :] < lengths[:, None]

    y = custom_batch_norm(x, mask)
    jax.block_until_ready(y)

    y_ref = _reference(x, mask)
    assert jnp.allclose(y, y_ref, atol=1e-4, rtol=1e-4), "mismatch vs reference"
    print("KERNEL_OK")
</pallas_src>

<mosaic_0001>
module attributes {stable_mosaic.version = 11 : i64} {
  func.func @_stats_kernel(%arg0: i32, %arg1: memref<8x128xf32, #tpu.memory_space<vmem>>, %arg2: memref<8x4xf32, #tpu.memory_space<vmem>>, %arg3: memref<4x128xf32, #tpu.memory_space<vmem>>, %arg4: memref<8x128xf32, #tpu.memory_space<vmem>>, %arg5: memref<8x128xf32, #tpu.memory_space<vmem>>) attributes {dimension_semantics = [#tpu.dimension_semantics<parallel>], iteration_bounds = array<i64: 1>, scalar_prefetch = 0 : i64, scratch_operands = 0 : i64, tpu.core_type = #tpu.core_type<tc>, window_params = [{transform_indices = @transform_0, window_bounds = array<i64: 8, 128>}, {transform_indices = @transform_1, window_bounds = array<i64: 8, 4>}, {pipeline_mode = #tpu.pipeline_mode<synchronous>, transform_indices = @transform_2, window_bounds = array<i64: 4, 128>}, {transform_indices = @transform_3, window_bounds = array<i64: 8, 128>}, {transform_indices = @transform_4, window_bounds = array<i64: 8, 128>}]} {
    %c0 = arith.constant 0 : index
    %c0_0 = arith.constant 0 : index
    %0 = vector.load %arg1[%c0, %c0_0] : memref<8x128xf32, #tpu.memory_space<vmem>>, vector<8x128xf32>
    %c0_1 = arith.constant 0 : index
    %c0_2 = arith.constant 0 : index
    %1 = vector.load %arg2[%c0_1, %c0_2] : memref<8x4xf32, #tpu.memory_space<vmem>>, vector<8x4xf32>
    %c0_3 = arith.constant 0 : index
    %c0_4 = arith.constant 0 : index
    %2 = vector.load %arg3[%c0_3, %c0_4] : memref<4x128xf32, #tpu.memory_space<vmem>>, vector<4x128xf32>
    %cst = arith.constant dense<0.000000e+00> : vector<8x128xf32>
    %3 = tpu.matmul %1, %2, %cst {dimension_numbers = #tpu.dot_dimension_numbers<[1], [0], [0], [1], [0, 0, 1, 1], [], []>} : vector<8x4xf32>, vector<4x128xf32>, vector<8x128xf32> -> vector<8x128xf32>
    %4 = arith.mulf %0, %3 : vector<8x128xf32>
    %5 = vector.shape_cast %4 : vector<8x128xf32> to vector<1x8x128xf32>
    %cst_5 = arith.constant dense<0.000000e+00> : vector<8x128xf32>
    %6 = vector.multi_reduction <add>, %5, %cst_5 [0] : vector<1x8x128xf32> to vector<8x128xf32>
    %c0_6 = arith.constant 0 : index
    %c0_7 = arith.constant 0 : index
    %7 = vector.load %arg4[%c0_6, %c0_7] : memref<8x128xf32, #tpu.memory_space<vmem>>, vector<8x128xf32>
    tpu.vector_store %arg4[%c0_6, %c0_7], %6 {strides = array<i32>} : memref<8x128xf32, #tpu.memory_space<vmem>>, vector<8x128xf32>,
    %8 = arith.mulf %4, %0 : vector<8x128xf32>
    %9 = vector.shape_cast %8 : vector<8x128xf32> to vector<1x8x128xf32>
    %cst_8 = arith.constant dense<0.000000e+00> : vector<8x128xf32>
    %10 = vector.multi_reduction <add>, %9, %cst_8 [0] : vector<1x8x128xf32> to vector<8x128xf32>
    %c0_9 = arith.constant 0 : index
    %c0_10 = arith.constant 0 : index
    %11 = vector.load %arg5[%c0_9, %c0_10] : memref<8x128xf32, #tpu.memory_space<vmem>>, vector<8x128xf32>
    tpu.vector_store %arg5[%c0_9, %c0_10], %10 {strides = array<i32>} : memref<8x128xf32, #tpu.memory_space<vmem>>, vector<8x128xf32>,
    return
  }
  func.func @transform_0(%arg0: i32) -> (i32, i32) {
    %c0_i32 = arith.constant 0 : i32
    %c0_i32_0 = arith.constant 0 : i32
    return %arg0, %c0_i32 : i32, i32
  }
  func.func @transform_1(%arg0: i32) -> (i32, i32) {
    %c0_i32 = arith.constant 0 : i32
    %c0_i32_0 = arith.constant 0 : i32
    return %arg0, %c0_i32 : i32, i32
  }
  func.func @transform_2(%arg0: i32) -> (i32, i32) {
    %c0_i32 = arith.constant 0 : i32
    %c0_i32_0 = arith.constant 0 : i32
    %c0_i32_1 = arith.constant 0 : i32
    return %c0_i32, %c0_i32_0 : i32, i32
  }
  func.func @transform_3(%arg0: i32) -> (i32, i32) {
    %c0_i32 = arith.constant 0 : i32
    %c0_i32_0 = arith.constant 0 : i32
    return %arg0, %c0_i32 : i32, i32
  }
  func.func @transform_4(%arg0: i32) -> (i32, i32) {
    %c0_i32 = arith.constant 0 : i32
    %c0_i32_0 = arith.constant 0 : i32
    return %arg0, %c0_i32 : i32, i32
  }
}

</mosaic_0001>

<llo_original>
// kernel: tpu_custom_call.1
$region0: #{tpu_custom_call.1}
  #allocation0 [shape = 'u32[]', space=smem, size = 0x4, offset = 0x4, fixed_abs, tag = 'smem constant byte address 0x4 - core index']
  #allocation1 [shape = 'u32[144,128]{1,0:T(1,128)}', space=vmem, size = 0x12000, scoped, tag = 'internal scratch']
  %s0 = inlined_call_operand.vmem [shape: f32[8,128], index: 0, kind: input, shape index: {}]
  %s1 = inlined_call_operand.vmem [shape: f32[8,4], index: 1, kind: input, shape index: {}]
  %s2 = inlined_call_operand.vmem [shape: f32[4,128], index: 2, kind: input, shape index: {}]
  %s3 = inlined_call_operand.hbm [shape: f32[8,128], index: 3, kind: output, shape index: {0}]
  %s4 = inlined_call_operand.hbm [shape: f32[8,128], index: 4, kind: output, shape index: {1}]
  %5 = xla_tuple %s3, %s4
  %s6 = sld [smem:[#allocation0]]
  $region30: #{tpu_custom_call.1} parent=0
    _
  %s8 = ssub.s32 1, %s6
  %s9 = scalar_select 0, %s8, %s6
  $region1: #{tpu_custom_call.1} parent=0
    #allocation2 [shape = 'u8[4096]{0}', space=vmem, size = 0x1000, scoped, tag = 'output window, operand 0, single buffered']
    #allocation3 [shape = 's32[1]{0}', space=sflag, size = 0x4, scoped, tag = 'scoped memory for tpu_custom_call.1']
    #allocation4 [shape = 'u8[4096]{0}', space=vmem, size = 0x1000, scoped, tag = 'output window, operand 1, single buffered']
    #allocation5 [shape = 's32[1]{0}', space=sflag, size = 0x4, scoped, tag = 'scoped memory for tpu_custom_call.1']
    %10 = vsyncpa [#allocation3], 0
    %11 = vsyncpa [#allocation5], 0
    // Predicated region
    $region2: #{tpu_custom_call.1} parent=1 // pred_check
      _
    $region3: #{tpu_custom_call.1} parent=1 // pred_check_branch
      %13 = sbr.rel (0) target = $region5
    $region4: #{tpu_custom_call.1} parent=1 // pred_region
      _
    $region5: #{tpu_custom_call.1} parent=1 // pred_fallthru
      _
    // Predicated region
    $region6: #{tpu_custom_call.1} parent=1 // pred_check
      _
    $region7: #{tpu_custom_call.1} parent=1 // pred_check_branch
      %15 = sbr.rel (0) target = $region9
    $region8: #{tpu_custom_call.1} parent=1 // pred_region
      _
    $region9: #{tpu_custom_call.1} parent=1 // pred_fallthru
      _
    // Predicated region
    $region10: #{tpu_custom_call.1} parent=1 // pred_check
      _
    $region11: #{tpu_custom_call.1} parent=1 // pred_check_branch
      %17 = sbr.rel (0) target = $region13
    $region12: #{tpu_custom_call.1} parent=1 // pred_region
      _
    $region13: #{tpu_custom_call.1} parent=1 // pred_fallthru
      _
    %v18 = vld [vmem:[%s0] sm:$0xff]
    %v19 = vld [vmem:[%s1] sm:$0xff]
    %v20 = vld [vmem:[%s2] sm:$0xf]
    %vm21 = vcmask 31744
    %v23 = vsel %vm21, %v19, 0
    %vm25 = vcmask 1043456
    %v27 = vsel %vm25, %v20, 0
    %29 = vmatprep.subr.mxu0 0.0
    %30 = vmatpush1.msra.mxu0 0.0
    %31 = vmatprep.subr.mxu0 0.0
    %32 = vmatpush1.msra.mxu0 0.0
    %33 = vmatprep.subr.mxu0 0.0
    %34 = vmatpush1.msra.mxu0 0.0
    %35 = vmatprep.subr.mxu0 0.0
    %36 = vmatpush1.msra.mxu0 0.0
    %37 = vmatprep.subr.mxu0 0.0
    %38 = vmatpush1.msra.mxu0 0.0
    %39 = vmatprep.subr.mxu0 0.0
    %40 = vmatpush1.msra.mxu0 0.0
    %41 = vmatprep.subr.mxu0 0.0
    %42 = vmatpush1.msra.mxu0 0.0
    %43 = vmatprep.subr.mxu0 0.0
    %44 = vmatpush1.msra.mxu0 0.0
    %45 = vmatprep.subr.mxu0 0.0
    %46 = vmatpush1.msra.mxu0 0.0
    %47 = vmatprep.subr.mxu0 0.0
    %48 = vmatpush1.msra.mxu0 0.0
    %49 = vmatprep.subr.mxu0 0.0
    %50 = vmatpush1.msra.mxu0 0.0
    %51 = vmatprep.subr.mxu0 0.0
    %52 = vmatpush1.msra.mxu0 0.0
    %53 = vmatprep.subr.mxu0 0.0
    %54 = vmatpush1.msra.mxu0 0.0
    %55 = vmatprep.subr.mxu0 0.0
    %56 = vmatpush1.msra.mxu0 0.0
    %57 = vmatprep.subr.mxu0 0.0
    %58 = vmatpush1.msra.mxu0 0.0
    %59 = vmatprep.subr.mxu0 0.0
    %60 = vmatpush1.msra.mxu0 %v27
    %61 = vmatprep.subr.mxu0 0.0
    %62 = vmatpush2.msra.mxu0 0.0
    %63 = vmatprep.subr.mxu0 0.0
    %64 = vmatpush2.msra.mxu0 0.0
    %65 = vmatprep.subr.mxu0 0.0
    %66 = vmatpush2.msra.mxu0 0.0
    %67 = vmatprep.subr.mxu0 0.0
    %68 = vmatpush2.msra.mxu0 0.0
    %69 = vmatprep.subr.mxu0 0.0
    %70 = vmatpush2.msra.mxu0 0.0
    %71 = vmatprep.subr.mxu0 0.0
    %72 = vmatpush2.msra.mxu0 0.0
    %73 = vmatprep.subr.mxu0 0.0
    %74 = vmatpush2.msra.mxu0 0.0
    %75 = vmatprep.subr.mxu0 0.0
    %76 = vmatpush2.msra.mxu0 0.0
    %77 = vmatprep.subr.mxu0 0.0
    %78 = vmatpush2.msra.mxu0 0.0
    %79 = vmatprep.subr.mxu0 0.0
    %80 = vmatpush2.msra.mxu0 0.0
    %81 = vmatprep.subr.mxu0 0.0
    %82 = vmatpush2.msra.mxu0 0.0
    %83 = vmatprep.subr.mxu0 0.0
    %84 = vmatpush2.msra.mxu0 0.0
    %85 = vmatprep.subr.mxu0 0.0
    %86 = vmatpush2.msra.mxu0 0.0
    %87 = vmatprep.subr.mxu0 0.0
    %88 = vmatpush2.msra.mxu0 0.0
    %89 = vmatprep.subr.mxu0 0.0
    %90 = vmatpush2.msra.mxu0 0.0
    %91 = vmatprep.subr.mxu0 0.0
    %92 = vmatpush2.msra.mxu0 0.0
    %93 = vmatprep.mubr.f32.mxu0 0.0
    %94 = vmatmul.mubr.f32.gmra.mxu0 %v23
    %v95 = vpop.f32.mrf.mxu0
    %v96 = vadd.f32 0.0, %v95
    %v97 = vpop.f32.mrf.mxu0
    %98 = vdwg.mxu0
    %v99 = vmul.f32 %v18, %v96
    %v100 = vadd.f32 %v99, 0.0
    %101 = vst [vmem:[#allocation2] sm:$0xff] %v100
    %v102 = vmul.f32 %v99, %v18
    %v103 = vadd.f32 %v102, 0.0
    %104 = vst [vmem:[#allocation4] sm:$0xff] %v103
    // Predicated region
    $region14: #{tpu_custom_call.1} parent=1 // pred_check
      _
    $region15: #{tpu_custom_call.1} parent=1 // pred_check_branch
      %106 = sbr.rel (0) target = $region17
    $region16: #{tpu_custom_call.1} parent=1 // pred_region
      %s108 = ssub.s32 128, 128
      %109 = vsyncadd [#allocation3], %s108
      %s111 = sshll.u32 [#allocation2], 4
      %s112 = int_to_ptr.vmem [resolvable:$true] %s111
      %114 = dma.vmem_to_hbm [thread:$0]  %s112, 128, %s3, [#allocation3]
    $region17: #{tpu_custom_call.1} parent=1 // pred_fallthru
      _
    // Predicated region
    $region18: #{tpu_custom_call.1} parent=1 // pred_check
      _
    $region19: #{tpu_custom_call.1} parent=1 // pred_check_branch
      %116 = sbr.rel (0) target = $region21
    $region20: #{tpu_custom_call.1} parent=1 // pred_region
      %s118 = ssub.s32 128, 128
      %119 = vsyncadd [#allocation5], %s118
      %s121 = sshll.u32 [#allocation4], 4
      %s122 = int_to_ptr.vmem [resolvable:$true] %s121
      %124 = dma.vmem_to_hbm [thread:$0]  %s122, 128, %s4, [#allocation5]
    $region21: #{tpu_custom_call.1} parent=1 // pred_fallthru
      _
    // Predicated region
    $region22: #{tpu_custom_call.1} parent=1 // pred_check
      _
    $region23: #{tpu_custom_call.1} parent=1 // pred_check_branch
      %126 = sbr.rel (0) target = $region25
    $region24: #{tpu_custom_call.1} parent=1 // pred_region
      %127 = dma.done [#allocation3], 128
    $region25: #{tpu_custom_call.1} parent=1 // pred_fallthru
      _
    // Predicated region
    $region26: #{tpu_custom_call.1} parent=1 // pred_check
      _
    $region27: #{tpu_custom_call.1} parent=1 // pred_check_branch
      %129 = sbr.rel (0) target = $region29
    $region28: #{tpu_custom_call.1} parent=1 // pred_region
      %130 = dma.done [#allocation5], 128
    $region29: #{tpu_custom_call.1} parent=1 // pred_fallthru
      _
    %131 = vsyncpa [#allocation3], 1
    %132 = vsyncpa [#allocation5], 1

</llo_original>
